<compile_context>
chip_gen: v7x
topology: tpu7x:2x2x1
jax: 0.10.0
libtpu: 0.0.40
codegen_flags: <defaults>
</compile_context>

<pallas_src>
import jax
import jax.numpy as jnp
from jax import lax
from jax.experimental import pallas as pl
from jax.experimental.pallas import tpu as pltpu


def _round_up(x, m):
    return ((x + m - 1) // m) * m


# ---------------------------------------------------------------------------
# Kernels
# ---------------------------------------------------------------------------
def _linear_kernel_f32(x_ref, w_ref, b_ref, o_ref):
    """One (tm, tn) output tile, f32 output: accumulate directly into o_ref.

    x_ref: (tm, tk) activation tile (native dtype)
    w_ref: (tn, tk) weight tile in nn.Linear's native (out, in) layout
    b_ref: (1,  tn) bias row
    """
    k = pl.program_id(2)

    @pl.when(k == 0)
    def _():
        o_ref[...] = jnp.zeros_like(o_ref)

    # Contract dim 1 of both operands == x @ W.T; MXU accumulates in f32.
    o_ref[...] += lax.dot_general(
        x_ref[...], w_ref[...],
        dimension_numbers=(((1,), (1,)), ((), ())),
        preferred_element_type=jnp.float32)

    @pl.when(k == pl.num_programs(2) - 1)
    def _():
        o_ref[...] += b_ref[...].astype(jnp.float32)


def _linear_kernel_acc(x_ref, w_ref, b_ref, o_ref, acc_ref):
    """Same tile, but with an f32 scratch accumulator for non-f32 outputs."""
    k = pl.program_id(2)

    @pl.when(k == 0)
    def _():
        acc_ref[...] = jnp.zeros_like(acc_ref)

    acc_ref[...] += lax.dot_general(
        x_ref[...], w_ref[...],
        dimension_numbers=(((1,), (1,)), ((), ())),
        preferred_element_type=jnp.float32)

    @pl.when(k == pl.num_programs(2) - 1)
    def _():
        o_ref[...] = (acc_ref[...] + b_ref[...].astype(jnp.float32)).astype(o_ref.dtype)


# ---------------------------------------------------------------------------
# Wrapper
# ---------------------------------------------------------------------------
def linear_pallas(h, weight, bias, *, tm=512, tn=512, tk=1024):
    """y = h @ weight.T + bias over the last dim of h (torch.nn.Linear forward).

    `weight` is consumed in its native (out_feats, in_feats) layout; no
    transpose copy and no dtype upcast are performed.
    """
    orig_shape = h.shape
    K = orig_shape[-1]
    N, Kw = weight.shape
    assert Kw == K, (weight.shape, K)

    x = h.reshape(-1, K)            # (M, K), native dtype
    w = weight                      # (N, K), native layout
    M = x.shape[0]
    out_dtype = x.dtype

    # ---- tile selection ---------------------------------------------------
    # Full-dim blocks are always layout-legal; otherwise keep (8, 128) alignment.
    def pick(dim, want, align):
        if dim <= want:
            return dim
        return max(align, (min(want, dim) // align) * align)

    tm_ = pick(M, tm, 8)
    tn_ = pick(N, tn, 128)
    tk_ = pick(K, tk, 128)

    # v7x megacore: give both TensorCores a parallel block when the problem
    # allows it at zero padding cost.
    if (pl.cdiv(M, tm_) * pl.cdiv(N, tn_)) < 2:
        if N >= 256 and N % 256 == 0:
            tn_ = N // 2
        elif M >= 16 and M % 16 == 0:
            tm_ = M // 2

    # Keep the double-buffered working set comfortably under v7x's 64 MiB VMEM.
    in_b = x.dtype.itemsize
    wt_b = w.dtype.itemsize
    bs_b = bias.dtype.itemsize
    out_b = jnp.dtype(out_dtype).itemsize
    use_acc = out_dtype != jnp.float32

    def working_set(tm_, tn_, tk_):
        ws = 2 * (tm_ * tk_ * in_b + tn_ * tk_ * wt_b + tn_ * bs_b)  # double-buffered inputs
        ws += 2 * tm_ * tn_ * out_b                                   # double-buffered output
        if use_acc:
            ws += tm_ * tn_ * 4                                       # f32 accumulator scratch
        return ws

    def shrink(t, align):
        return max(align, ((t // 2) // align) * align)

    budget = 44 << 20
    while working_set(tm_, tn_, tk_) > budget and (tk_ > 128 or tn_ > 128 or tm_ > 8):
        if tk_ > 128:
            tk_ = shrink(tk_, 128)
        elif tn_ > 128:
            tn_ = shrink(tn_, 128)
        else:
            tm_ = shrink(tm_, 8)

    # ---- padding (only where actually required) ----------------------------
    Mp, Np, Kp = _round_up(M, tm_), _round_up(N, tn_), _round_up(K, tk_)
    # K (reduction) padding MUST be zero-filled; M/N padding is sliced away below.
    x_p = x if (Mp == M and Kp == K) else jnp.pad(x, ((0, Mp - M), (0, Kp - K)))
    w_p = w if (Np == N and Kp == K) else jnp.pad(w, ((0, Np - N), (0, Kp - K)))
    b2 = bias.reshape(1, N)
    b_p = b2 if Np == N else jnp.pad(b2, ((0, 0), (0, Np - N)))

    grid = (Mp // tm_, Np // tn_, Kp // tk_)

    kernel = _linear_kernel_acc if use_acc else _linear_kernel_f32
    scratch = [pltpu.VMEM((tm_, tn_), jnp.float32)] if use_acc else []

    vmem_limit = int(min(working_set(tm_, tn_, tk_) + (16 << 20), 56 << 20))

    out_p = pl.pallas_call(
        kernel,
        out_shape=jax.ShapeDtypeStruct((Mp, Np), out_dtype),
        grid_spec=pltpu.PrefetchScalarGridSpec(
            num_scalar_prefetch=0,
            grid=grid,
            in_specs=[
                pl.BlockSpec((tm_, tk_), lambda i, j, k: (i, k)),   # activation tile
                pl.BlockSpec((tn_, tk_), lambda i, j, k: (j, k)),   # weight tile, (N, K) layout
                pl.BlockSpec((1, tn_), lambda i, j, k: (0, j)),     # bias row
            ],
            out_specs=pl.BlockSpec((tm_, tn_), lambda i, j, k: (i, j)),
            scratch_shapes=scratch,
        ),
        compiler_params=pltpu.CompilerParams(
            dimension_semantics=("parallel", "parallel", "arbitrary"),
            vmem_limit_bytes=vmem_limit,
        ),
    )(x_p, w_p, b_p)

    out = out_p if (Mp == M and Np == N) else out_p[:M, :N]
    return out.reshape(*orig_shape[:-1], N)


class LinearWrapperPallas:
    """Mirror of the PyTorch LinearWrapper module (a single nn.Linear)."""

    def __init__(self, in_feats, out_feats, key):
        # torch.nn.Linear default init: U(-1/sqrt(in), 1/sqrt(in)) for weight and bias.
        bound = 1.0 / (in_feats ** 0.5)
        kw, kb = jax.random.split(key)
        # Weight kept in nn.Linear's native (out, in) layout; the kernel consumes
        # it directly (contraction on dim 1), so no per-call transpose is needed.
        self.weight = jax.random.uniform(kw, (out_feats, in_feats), jnp.float32,
                                         minval=-bound, maxval=bound)
        self.bias = jax.random.uniform(kb, (out_feats,), jnp.float32,
                                       minval=-bound, maxval=bound)

    def forward(self, h):
        return linear_pallas(h, self.weight, self.bias)

    def forward_reference(self, h):
        y = jnp.matmul(h, self.weight.T, precision=lax.Precision.HIGHEST)
        return y + self.bias


if __name__ == "__main__":
    key = jax.random.PRNGKey(0)
    kh, kparam, kh2 = jax.random.split(key, 3)

    in_feats, out_feats = 32, 48
    model = LinearWrapperPallas(in_feats, out_feats, kparam)

    # nn.Linear applies to the last dim; leading batch dims are arbitrary.
    h = jax.random.normal(kh, (2, 16, in_feats), jnp.float32)
    out = model.forward(h)
    jax.block_until_ready(out)
    ref = model.forward_reference(h)
    assert out.shape == ref.shape, (out.shape, ref.shape)
    assert jnp.allclose(out, ref, atol=2e-3, rtol=2e-3), "Pallas linear mismatch (f32)"

    # Unaligned K/N with a multi-step (zero-padded) K reduction.
    model2 = LinearWrapperPallas(200, 144, jax.random.PRNGKey(42))
    h2 = jax.random.normal(kh2, (4, 8, 200), jnp.float32)
    out2 = linear_pallas(h2, model2.weight, model2.bias, tk=128)
    jax.block_until_ready(out2)
    ref2 = model2.forward_reference(h2)
    assert out2.shape == ref2.shape
    assert jnp.allclose(out2, ref2, atol=2e-3, rtol=2e-3), "Pallas linear mismatch (padded K)"

    # Native bf16 path (MXU-native inputs, f32 accumulation, bf16 output).
    h_bf = h.astype(jnp.bfloat16)
    w_bf = model.weight.astype(jnp.bfloat16)
    b_bf = model.bias.astype(jnp.bfloat16)
    out3 = linear_pallas(h_bf, w_bf, b_bf)
    jax.block_until_ready(out3)
    ref3 = (jnp.matmul(h_bf.astype(jnp.float32), w_bf.astype(jnp.float32).T,
                       precision=lax.Precision.HIGHEST)
            + b_bf.astype(jnp.float32))
    assert out3.dtype == jnp.bfloat16
    assert jnp.allclose(out3.astype(jnp.float32), ref3, atol=5e-2, rtol=5e-2), \
        "Pallas linear mismatch (bf16)"

    print("KERNEL_OK")
</pallas_src>

<mosaic_0001>
module attributes {stable_mosaic.version = 11 : i64} {
  func.func @_linear_kernel_f32(%arg0: i32, %arg1: i32, %arg2: i32, %arg3: memref<16x32xf32, #tpu.memory_space<vmem>>, %arg4: memref<48x32xf32, #tpu.memory_space<vmem>>, %arg5: memref<1x48xf32, #tpu.memory_space<vmem>>, %arg6: memref<16x48xf32, #tpu.memory_space<vmem>>) attributes {dimension_semantics = [#tpu.dimension_semantics<parallel>, #tpu.dimension_semantics<parallel>, #tpu.dimension_semantics<arbitrary>], iteration_bounds = array<i64: 2, 1, 1>, scalar_prefetch = 0 : i64, scratch_operands = 0 : i64, tpu.core_type = #tpu.core_type<tc>, window_params = [{transform_indices = @transform_0, window_bounds = array<i64: 16, 32>}, {transform_indices = @transform_1, window_bounds = array<i64: 48, 32>}, {transform_indices = @transform_2, window_bounds = array<i64: 1, 48>}, {transform_indices = @transform_3, window_bounds = array<i64: 16, 48>}]} {
    %c0_i32 = arith.constant 0 : i32
    %0 = arith.cmpi eq, %arg2, %c0_i32 : i32
    %1 = arith.extui %0 : i1 to i32
    %c0_i32_0 = arith.constant 0 : i32
    %2 = arith.cmpi ne, %1, %c0_i32_0 : i32
    scf.if %2 {
      %cst_10 = arith.constant 0.000000e+00 : f32
      %12 = vector.broadcast %cst_10 : f32 to vector<16x48xf32>
      %c0_11 = arith.constant 0 : index
      %c0_12 = arith.constant 0 : index
      %13 = vector.load %arg6[%c0_11, %c0_12] : memref<16x48xf32, #tpu.memory_space<vmem>>, vector<16x48xf32>
      tpu.vector_store %arg6[%c0_11, %c0_12], %12 {strides = array<i32>} : memref<16x48xf32, #tpu.memory_space<vmem>>, vector<16x48xf32>,
    } else {
    }
    %c0 = arith.constant 0 : index
    %c0_1 = arith.constant 0 : index
    %3 = vector.load %arg6[%c0, %c0_1] : memref<16x48xf32, #tpu.memory_space<vmem>>, vector<16x48xf32>
    %c0_2 = arith.constant 0 : index
    %c0_3 = arith.constant 0 : index
    %4 = vector.load %arg3[%c0_2, %c0_3] : memref<16x32xf32, #tpu.memory_space<vmem>>, vector<16x32xf32>
    %c0_4 = arith.constant 0 : index
    %c0_5 = arith.constant 0 : index
    %5 = vector.load %arg4[%c0_4, %c0_5] : memref<48x32xf32, #tpu.memory_space<vmem>>, vector<48x32xf32>
    %cst = arith.constant dense<0.000000e+00> : vector<16x48xf32>
    %6 = tpu.matmul %4, %5, %cst {dimension_numbers = #tpu.dot_dimension_numbers<[1], [1], [0], [0], [0, 0, 1, 0], [], []>} : vector<16x32xf32>, vector<48x32xf32>, vector<16x48xf32> -> vector<16x48xf32>
    %7 = arith.addf %3, %6 : vector<16x48xf32>
    %c0_6 = arith.constant 0 : index
    %c0_7 = arith.constant 0 : index
    %8 = vector.load %arg6[%c0_6, %c0_7] : memref<16x48xf32, #tpu.memory_space<vmem>>, vector<16x48xf32>
    tpu.vector_store %arg6[%c0_6, %c0_7], %7 {strides = array<i32>} : memref<16x48xf32, #tpu.memory_space<vmem>>, vector<16x48xf32>,
    %c0_i32_8 = arith.constant 0 : i32
    %9 = arith.cmpi eq, %arg2, %c0_i32_8 : i32
    %10 = arith.extui %9 : i1 to i32
    %c0_i32_9 = arith.constant 0 : i32
    %11 = arith.cmpi ne, %10, %c0_i32_9 : i32
    scf.if %11 {
      %c0_10 = arith.constant 0 : index
      %c0_11 = arith.constant 0 : index
      %12 = vector.load %arg6[%c0_10, %c0_11] : memref<16x48xf32, #tpu.memory_space<vmem>>, vector<16x48xf32>
      %c0_12 = arith.constant 0 : index
      %c0_13 = arith.constant 0 : index
      %13 = vector.load %arg5[%c0_12, %c0_13] : memref<1x48xf32, #tpu.memory_space<vmem>>, vector<1x48xf32>
      %14 = vector.broadcast %13 : vector<1x48xf32> to vector<16x48xf32>
      %15 = arith.addf %12, %14 : vector<16x48xf32>
      %c0_14 = arith.constant 0 : index
      %c0_15 = arith.constant 0 : index
      %16 = vector.load %arg6[%c0_14, %c0_15] : memref<16x48xf32, #tpu.memory_space<vmem>>, vector<16x48xf32>
      tpu.vector_store %arg6[%c0_14, %c0_15], %15 {strides = array<i32>} : memref<16x48xf32, #tpu.memory_space<vmem>>, vector<16x48xf32>,
    } else {
    }
    return
  }
  func.func @transform_0(%arg0: i32, %arg1: i32, %arg2: i32) -> (i32, i32) {
    %c0_i32 = arith.constant 0 : i32
    return %arg0, %arg2 : i32, i32
  }
  func.func @transform_1(%arg0: i32, %arg1: i32, %arg2: i32) -> (i32, i32) {
    %c0_i32 = arith.constant 0 : i32
    return %arg1, %arg2 : i32, i32
  }
  func.func @transform_2(%arg0: i32, %arg1: i32, %arg2: i32) -> (i32, i32) {
    %c0_i32 = arith.constant 0 : i32
    %c0_i32_0 = arith.constant 0 : i32
    return %c0_i32, %arg1 : i32, i32
  }
  func.func @transform_3(%arg0: i32, %arg1: i32, %arg2: i32) -> (i32, i32) {
    %c0_i32 = arith.constant 0 : i32
    return %arg0, %arg1 : i32, i32
  }
}

</mosaic_0001>

<llo_original>
// kernel: tpu_custom_call.1
$region0: #{tpu_custom_call.1}
  #allocation0 [shape = 'u32[]', space=smem, size = 0x4, offset = 0x4, fixed_abs, tag = 'smem constant byte address 0x4 - core index']
  #allocation1 [shape = 'u32[144,128]{1,0:T(1,128)}', space=vmem, size = 0x12000, scoped, tag = 'internal scratch']
  %s0 = inlined_call_operand.vmem [shape: f32[32,32], index: 0, kind: input, shape index: {}]
  %s1 = inlined_call_operand.vmem [shape: f32[48,32], index: 1, kind: input, shape index: {}]
  %s2 = inlined_call_operand.vmem [shape: f32[1,48], index: 2, kind: input, shape index: {}]
  %s3 = inlined_call_operand.hbm [shape: f32[32,48], index: 3, kind: output, shape index: {}]
  %s4 = sld [smem:[#allocation0]]
  $region53: #{tpu_custom_call.1} parent=0
    _
  %s6 = ssub.s32 1, %s4
  %s7 = scalar_select 0, %s6, %s4
  $region1: #{tpu_custom_call.1} parent=0
    #allocation2 [shape = 'u8[16384]{0}', space=vmem, size = 0x4000, scoped, tag = 'output window, operand 0']
    #allocation3 [shape = 's32[2]{0}', space=sflag, size = 0x8, scoped, tag = 'scoped memory for tpu_custom_call.1']
    %8 = vsyncpa [#allocation3], 0
    %s9 = scalar_lea.sflag [#allocation3], 1
    %10 = vsyncpa %s9, 0
    loop: start=0, step=1, limit=4
    $region2: #{tpu_custom_call.1} parent=1 // loop_pre_header
      _
    $region3: #{tpu_custom_call.1} parent=1 // loop_header
      %s12 = sphi 0, %s16
      %p13 = scmp.ge.s32.totalorder %s12, 4
      %s19 = sphi 0, %s38
      %s20 = sphi 0, %s34
      %s21 = sphi 0, %s30
      %s22 = sphi 0, %s19
      %s23 = sphi 0, %s20
      %s24 = sphi 0, %s21
      %s25 = sphi 0, %s22
      %s26 = sphi 0, %s23
      %s27 = sphi 0, %s24
      %s43 = sphi 0, %s45
      %s46 = sphi 0, %s43
      %s47 = sphi 0, %s46
      %s63 = sphi 0, %s47
      %s71 = sphi 0, %s73
      %s74 = sphi 0, %s71
      %s75 = sphi 0, %s74
      %s91 = sphi 0, %s75
      %s97 = sphi 0, %s99
      %s100 = sphi 0, %s97
      %s101 = sphi 0, %s100
      %s117 = sphi 0, %s101
      %s125 = sphi 0, %s127
      %s128 = sphi 0, %s125
      %s129 = sphi 0, %s128
      %s145 = sphi 0, %s129
    $region4: #{tpu_custom_call.1} parent=1 // loop_header_branch
      %15 = sbr.rel (%p13) target = $region8
    $region5: #{tpu_custom_call.1} parent=1 // loop_body
      %s17 = ssub.s32 %s12, 1
      %s18 = ssub.s32 %s12, 2
      %s28 = sadd.s32 1, %s21
      %p29 = scmp.ge.s32.totalorder %s28, 1
      %s30 = scalar_select %p29, 0, %s28
      %s31 = sadd.s32 1, %s20
      %s32 = scalar_select %p29, %s31, %s20
      %p33 = scmp.ge.s32.totalorder %s32, 1
      %s34 = scalar_select %p33, 0, %s32
      %s35 = sadd.s32 1, %s19
      %s36 = scalar_select %p33, %s35, %s19
      %p37 = scmp.ge.s32.totalorder %s36, 2
      %s38 = scalar_select %p37, 0, %s36
      %s39 = ssub.s32 %s19, %s38
      %s40 = ssub.s32 %s21, %s30
      %s41 = sor.u32 %s39, %s40
      %p42 = scmp.eq.s32.totalorder %s41, 0
      %s44 = sadd.s32 %s43, 1
      %s45 = scalar_select %p42, %s43, %s44
      %p48 = pneg %p42
      %p49 = scmp.eq.s32.totalorder %s12, 1
      %p50 = por %p48, %p49
      %p51 = scmp.ne.s32.totalorder %s43, %s46
      %p52 = scmp.eq.s32.totalorder %s12, 0
      %p53 = por %p51, %p52
      %p54 = scmp.ne.s32.totalorder %s43, %s46
      %p55 = scmp.eq.s32.totalorder %s17, 1
      %p56 = por %p54, %p55
      %p57 = scmp.ne.s32.totalorder %s46, %s47
      %p58 = scmp.eq.s32.totalorder %s17, 0
      %p59 = por %p57, %p58
      %p60 = scmp.ne.s32.totalorder %s46, %s47
      %p61 = scmp.eq.s32.totalorder %s18, 1
      %p62 = por %p60, %p61
      %p64 = scmp.ne.s32.totalorder %s47, %s63
      %p65 = scmp.eq.s32.totalorder %s18, 0
      %p66 = por %p64, %p65
      %s67 = ssub.s32 %s20, %s34
      %s68 = ssub.s32 %s21, %s30
      %s69 = sor.u32 %s67, %s68
      %p70 = scmp.eq.s32.totalorder %s69, 0
      %s72 = sadd.s32 %s71, 1
      %s73 = scalar_select %p70, %s71, %s72
      %p76 = pneg %p70
      %p77 = scmp.eq.s32.totalorder %s12, 1
      %p78 = por %p76, %p77
      %p79 = scmp.ne.s32.totalorder %s71, %s74
      %p80 = scmp.eq.s32.totalorder %s12, 0
      %p81 = por %p79, %p80
      %p82 = scmp.ne.s32.totalorder %s71, %s74
      %p83 = scmp.eq.s32.totalorder %s17, 1
      %p84 = por %p82, %p83
      %p85 = scmp.ne.s32.totalorder %s74, %s75
      %p86 = scmp.eq.s32.totalorder %s17, 0
      %p87 = por %p85, %p86
      %p88 = scmp.ne.s32.totalorder %s74, %s75
      %p89 = scmp.eq.s32.totalorder %s18, 1
      %p90 = por %p88, %p89
      %p92 = scmp.ne.s32.totalorder %s75, %s91
      %p93 = scmp.eq.s32.totalorder %s18, 0
      %p94 = por %p92, %p93
      %s95 = ssub.s32 %s20, %s34
      %p96 = scmp.eq.s32.totalorder %s95, 0
      %s98 = sadd.s32 %s97, 1
      %s99 = scalar_select %p96, %s97, %s98
      %p102 = pneg %p96
      %p103 = scmp.eq.s32.totalorder %s12, 1
      %p104 = por %p102, %p103
      %p105 = scmp.ne.s32.totalorder %s97, %s100
      %p106 = scmp.eq.s32.totalorder %s12, 0
      %p107 = por %p105, %p106
      %p108 = scmp.ne.s32.totalorder %s97, %s100
      %p109 = scmp.eq.s32.totalorder %s17, 1
      %p110 = por %p108, %p109
      %p111 = scmp.ne.s32.totalorder %s100, %s101
      %p112 = scmp.eq.s32.totalorder %s17, 0
      %p113 = por %p111, %p112
      %p114 = scmp.ne.s32.totalorder %s100, %s101
      %p115 = scmp.eq.s32.totalorder %s18, 1
      %p116 = por %p114, %p115
      %p118 = scmp.ne.s32.totalorder %s101, %s117
      %p119 = scmp.eq.s32.totalorder %s18, 0
      %p120 = por %p118, %p119
      %s121 = ssub.s32 %s19, %s38
      %s122 = ssub.s32 %s20, %s34
      %s123 = sor.u32 %s121, %s122
      %p124 = scmp.eq.s32.totalorder %s123, 0
      %s126 = sadd.s32 %s125, 1
      %s127 = scalar_select %p124, %s125, %s126
      %p130 = pneg %p124
      %p131 = scmp.eq.s32.totalorder %s12, 1
      %p132 = por %p130, %p131
      %p133 = scmp.ne.s32.totalorder %s125, %s128
      %p134 = scmp.eq.s32.totalorder %s12, 0
      %p135 = por %p133, %p134
      %p136 = scmp.ne.s32.totalorder %s125, %s128
      %p137 = scmp.eq.s32.totalorder %s17, 1
      %p138 = por %p136, %p137
      %p139 = scmp.ne.s32.totalorder %s128, %s129
      %p140 = scmp.eq.s32.totalorder %s17, 0
      %p141 = por %p139, %p140
      %p142 = scmp.ne.s32.totalorder %s128, %s129
      %p143 = scmp.eq.s32.totalorder %s18, 1
      %p144 = por %p142, %p143
      %p146 = scmp.ne.s32.totalorder %s129, %s145
      %p147 = scmp.eq.s32.totalorder %s18, 0
      %p148 = por %p146, %p147
      %p149 = scmp.le.s32.totalorder 1, %s12
      %p150 = scmp.lt.s32.totalorder %s12, 3
      %p151 = pnand %p149, %p150
      %p152 = pneg %p151
      // Predicated region
      $region9: #{tpu_custom_call.1} parent=5 // pred_check
        _
      $region10: #{tpu_custom_call.1} parent=5 // pred_check_branch
        %154 = sbr.rel (%p151) target = $region12
      $region11: #{tpu_custom_call.1} parent=5 // pred_region
        %s155 = ssub.s32 %s12, 1
        // Predicated region
        $region13: #{tpu_custom_call.1} parent=11 // pred_check
          %p156 = pneg %p87
        $region14: #{tpu_custom_call.1} parent=11 // pred_check_branch
          %158 = sbr.rel (%p156) target = $region16
        $region15: #{tpu_custom_call.1} parent=11 // pred_region
          %s159 = smul.u32 6, %s23
          %p160 = scmp.lt.s32.totalorder %s159, 5
          %s161 = scalar_select %p160, %s159, 5
          %p162 = scmp.lt.s32.totalorder %s24, 0
          %s163 = scalar_select %p162, %s24, 0
          %s164 = sadd.s32 %s163, %s161
          %s165 = smul.addr %s164, 8
          %s166 = scalar_lea.vmem %s1, %s165
          %s167 = smul.u32 6, %s23
        $region16: #{tpu_custom_call.1} parent=11 // pred_fallthru
          _
        // Predicated region
        $region17: #{tpu_custom_call.1} parent=11 // pred_check
          %p168 = pneg %p113
        $region18: #{tpu_custom_call.1} parent=11 // pred_check_branch
          %170 = sbr.rel (%p168) target = $region20
        $region19: #{tpu_custom_call.1} parent=11 // pred_region
          %p171 = scmp.lt.s32.totalorder %s23, 0
          %s172 = scalar_select %p171, %s23, 0
          %s173 = scalar_lea.vmem %s2, %s172
        $region20: #{tpu_custom_call.1} parent=11 // pred_fallthru
          _
      $region12: #{tpu_custom_call.1} parent=5 // pred_fallthru
        _
      %p174 = scmp.lt.s32.totalorder %s12, 2
      // Predicated region
      $region21: #{tpu_custom_call.1} parent=5 // pred_check
        %p175 = pneg %p174
      $region22: #{tpu_custom_call.1} parent=5 // pred_check_branch
        %177 = sbr.rel (%p175) target = $region24
      $region23: #{tpu_custom_call.1} parent=5 // pred_region
        // Predicated region
        $region25: #{tpu_custom_call.1} parent=23 // pred_check
          %p178 = pneg %p53
        $region26: #{tpu_custom_call.1} parent=23 // pred_check_branch
          %180 = sbr.rel (%p178) target = $region28
        $region27: #{tpu_custom_call.1} parent=23 // pred_region
          %s181 = smul.u32 2, %s19
          %p182 = scmp.lt.s32.totalorder %s181, 3
          %s183 = scalar_select %p182, %s181, 3
          %p184 = scmp.lt.s32.totalorder %s21, 0
          %s185 = scalar_select %p184, %s21, 0
          %s186 = sadd.s32 %s185, %s183
          %s187 = smul.addr %s186, 8
          %s188 = scalar_lea.vmem %s0, %s187
          %s189 = smul.u32 2, %s19
        $region28: #{tpu_custom_call.1} parent=23 // pred_fallthru
          _
      $region24: #{tpu_custom_call.1} parent=5 // pred_fallthru
        _
      %p190 = scmp.le.s32.totalorder 1, %s12
      %p191 = scmp.lt.s32.totalorder %s12, 3
      %p192 = pnand %p190, %p191
      %p193 = pneg %p192
      // Predicated region
      $region29: #{tpu_custom_call.1} parent=5 // pred_check
        _
      $region30: #{tpu_custom_call.1} parent=5 // pred_check_branch
        %195 = sbr.rel (%p192) target = $region32
      $region31: #{tpu_custom_call.1} parent=5 // pred_region
        %s196 = ssub.s32 %s12, 1
        %s197 = smul.u32 2, %s22
        %p198 = scmp.lt.s32.totalorder %s197, 3
        %s199 = scalar_select %p198, %s197, 3
        %p200 = scmp.lt.s32.totalorder %s24, 0
        %s201 = scalar_select %p200, %s24, 0
        %s202 = sadd.s32 %s201, %s199
        %s203 = smul.addr %s202, 8
        %s204 = scalar_lea.vmem %s0, %s203
        %p205 = pneg %p59
        %p206 = pneg %p56
        %s207 = smul.u32 6, %s23
        %p208 = scmp.lt.s32.totalorder %s207, 5
        %s209 = scalar_select %p208, %s207, 5
        %p210 = scmp.lt.s32.totalorder %s24, 0
        %s211 = scalar_select %p210, %s24, 0
        %s212 = sadd.s32 %s211, %s209
        %s213 = smul.addr %s212, 8
        %s214 = scalar_lea.vmem %s1, %s213
        %p215 = pneg %p87
        %p216 = pneg %p84
        %p217 = scmp.lt.s32.totalorder %s23, 0
        %s218 = scalar_select %p217, %s23, 0
        %s219 = scalar_lea.vmem %s2, %s218
        %p220 = pneg %p113
        %p221 = pneg %p110
        %p222 = pneg %p141
        %p223 = pneg %p138
        %s224 = sand.u32 %s128, 1
        %s225 = scalar_lea.sflag [#allocation3], %s224
        %s226 = sand.u32 %s128, 1
        %s227 = smul.addr %s226, 16
        %s228 = scalar_lea.vmem [#allocation2], %s227
        %s229 = smul.u32 2, %s22
        %p230 = scmp.lt.s32.totalorder %s229, 3
        %s231 = scalar_select %p230, %s229, 3
        %p232 = scmp.lt.s32.totalorder %s24, 0
        %s233 = scalar_select %p232, %s24, 0
        %s234 = sadd.s32 %s233, %s231
        %s235 = smul.addr %s234, 8
        %s236 = scalar_lea.vmem %s0, %s235
        %s237 = smul.u32 2, %s22
        %s238 = smul.u32 6, %s23
        %p239 = scmp.lt.s32.totalorder %s238, 5
        %s240 = scalar_select %p239, %s238, 5
        %p241 = scmp.lt.s32.totalorder %s24, 0
        %s242 = scalar_select %p241, %s24, 0
        %s243 = sadd.s32 %s242, %s240
        %s244 = smul.addr %s243, 8
        %s245 = scalar_lea.vmem %s1, %s244
        %s246 = smul.u32 6, %s23
        %p247 = scmp.lt.s32.totalorder %s23, 0
        %s248 = scalar_select %p247, %s23, 0
        %s249 = scalar_lea.vmem %s2, %s248
        %s250 = smul.u32 2, %s22
        %p251 = scmp.eq.s32.totalorder %s24, 0
        // Predicated region
        $region33: #{tpu_custom_call.1} parent=31 // pred_check
          %p252 = pneg %p251
        $region34: #{tpu_custom_call.1} parent=31 // pred_check_branch
          %254 = sbr.rel (%p252) target = $region36
        $region35: #{tpu_custom_call.1} parent=31 // pred_region
          %vm255 = vcmask 392192
          %256 = vst.msk [vmem:[%s228] sm:$0xff] %vm255, 0.0
          %257 = vst.msk [vmem:[%s228 + $0x8] sm:$0xff] %vm255, 0.0
        $region36: #{tpu_custom_call.1} parent=31 // pred_fallthru
          _
        %v258 = vld [vmem:[%s228] sm:$0xff]
        %v259 = vld [vmem:[%s228 + $0x8] sm:$0xff]
        %v260 = vld [vmem:[%s236] sm:$0xff]
        %v261 = vld [vmem:[%s236 + $0x8] sm:$0xff]
        %v262 = vld [vmem:[%s245] sm:$0xff]
        %v263 = vld [vmem:[%s245 + $0x8] sm:$0xff]
        %v264 = vld [vmem:[%s245 + $0x10] sm:$0xff]
        %v265 = vld [vmem:[%s245 + $0x18] sm:$0xff]
        %v266 = vld [vmem:[%s245 + $0x20] sm:$0xff]
        %v267 = vld [vmem:[%s245 + $0x28] sm:$0xff]
        %vm268 = vcmask 261120
        %v270 = vsel %vm268, %v260, 0
        %v273 = vsel %vm268, %v261, 0
        %v276 = vsel %vm268, %v262, 0
        %v279 = vsel %vm268, %v263, 0
        %v282 = vsel %vm268, %v264, 0
        %v285 = vsel %vm268, %v265, 0
        %v288 = vsel %vm268, %v266, 0
        %v291 = vsel %vm268, %v267, 0
        %293 = vmatprep.subr.mxu0 0.0
        %294 = vmatpush1.xpose.msra.mxu0 %v276
        %295 = vmatprep.subr.mxu0 0.0
        %296 = vmatpush1.xpose.msra.mxu0 %v279
        %297 = vmatprep.subr.mxu0 0.0
        %298 = vmatpush1.xpose.msra.mxu0 %v282
        %299 = vmatprep.subr.mxu0 0.0
        %300 = vmatpush1.xpose.msra.mxu0 %v285
        %301 = vmatprep.subr.mxu0 0.0
        %302 = vmatpush1.xpose.msra.mxu0 %v288
        %303 = vmatprep.subr.mxu0 0.0
        %304 = vmatpush1.xpose.msra.mxu0 %v291
        %305 = vmatprep.subr.mxu0 0.0
        %306 = vmatpush1.xpose.msra.mxu0 0.0
        %307 = vmatprep.subr.mxu0 0.0
        %308 = vmatpush1.xpose.msra.mxu0 0.0
        %309 = vmatprep.subr.mxu0 0.0
        %310 = vmatpush1.xpose.msra.mxu0 0.0
        %311 = vmatprep.subr.mxu0 0.0
        %312 = vmatpush1.xpose.msra.mxu0 0.0
        %313 = vmatprep.subr.mxu0 0.0
        %314 = vmatpush1.xpose.msra.mxu0 0.0
        %315 = vmatprep.subr.mxu0 0.0
        %316 = vmatpush1.xpose.msra.mxu0 0.0
        %317 = vmatprep.subr.mxu0 0.0
        %318 = vmatpush1.xpose.msra.mxu0 0.0
        %319 = vmatprep.subr.mxu0 0.0
        %320 = vmatpush1.xpose.msra.mxu0 0.0
        %321 = vmatprep.subr.mxu0 0.0
        %322 = vmatpush1.xpose.msra.mxu0 0.0
        %323 = vmatprep.subr.mxu0 0.0
        %324 = vmatpush1.xpose.msra.mxu0 0.0
        %325 = vmatprep.subr.mxu0 0.0
        %326 = vmatpush1.xpose.msra.mxu0 0.0
        %327 = vmatprep.subr.mxu0 0.0
        %328 = vmatpush1.xpose.msra.mxu0 0.0
        %329 = vmatprep.subr.mxu0 0.0
        %330 = vmatpush1.xpose.msra.mxu0 0.0
        %331 = vmatprep.subr.mxu0 0.0
        %332 = vmatpush1.xpose.msra.mxu0 0.0
        %333 = vmatprep.subr.mxu0 0.0
        %334 = vmatpush1.xpose.msra.mxu0 0.0
        %335 = vmatprep.subr.mxu0 0.0
        %336 = vmatpush1.xpose.msra.mxu0 0.0
        %337 = vmatprep.subr.mxu0 0.0
        %338 = vmatpush1.xpose.msra.mxu0 0.0
        %339 = vmatprep.subr.mxu0 0.0
        %340 = vmatpush1.xpose.msra.mxu0 0.0
        %341 = vmatprep.subr.mxu0 0.0
        %342 = vmatpush1.xpose.msra.mxu0 0.0
        %343 = vmatprep.subr.mxu0 0.0
        %344 = vmatpush1.xpose.msra.mxu0 0.0
        %345 = vmatprep.subr.mxu0 0.0
        %346 = vmatpush1.xpose.msra.mxu0 0.0
        %347 = vmatprep.subr.mxu0 0.0
        %348 = vmatpush1.xpose.msra.mxu0 0.0
        %349 = vmatprep.subr.mxu0 0.0
        %350 = vmatpush1.xpose.msra.mxu0 0.0
        %351 = vmatprep.subr.mxu0 0.0
        %352 = vmatpush1.xpose.msra.mxu0 0.0
        %353 = vmatprep.subr.mxu0 0.0
        %354 = vmatpush1.xpose.msra.mxu0 0.0
        %355 = vmatprep.subr.mxu0 0.0
        %356 = vmatpush1.xpose.msra.mxu0 0.0
        %357 = vmatprep.mubr.f32.mxu0 0.0
        %358 = vmatmul.mubr.f32.gmra.mrb[0].mxu0 %v270
        %v359 = vpop.f32.mrb[0].mxu0
        %v360 = vadd.f32 0.0, %v359
        %v361 = vpop.f32.mrb[0].mxu0
        %362 = vmatprep.mubr.f32.mxu0 0.0
        %363 = vmatmul.mubr.f32.gmra.mrb[0].mxu0 %v273
        %v364 = vpop.f32.mrb[0].mxu0
        %v365 = vadd.f32 0.0, %v364
        %v366 = vpop.f32.mrb[0].mxu0
        %367 = vdwg.mxu0
        %v368 = vadd.f32 %v258, %v360
        %v369 = vadd.f32 %v259, %v365
        %vm370 = vcmask 392192
        %371 = vst.msk [vmem:[%s228] sm:$0xff] %vm370, %v368
        %372 = vst.msk [vmem:[%s228 + $0x8] sm:$0xff] %vm370, %v369
        // Predicated region
        $region37: #{tpu_custom_call.1} parent=31 // pred_check
          %p373 = pneg %p251
        $region38: #{tpu_custom_call.1} parent=31 // pred_check_branch
          %375 = sbr.rel (%p373) target = $region40
        $region39: #{tpu_custom_call.1} parent=31 // pred_region
          %v376 = vld [vmem:[%s228] sm:$0xff]
          %v377 = vld [vmem:[%s228 + $0x8] sm:$0xff]
          %v378 = vld [vmem:[%s249] sm:$0x1]
          %v380 = vlaneseq
          %v381 = vshrl.u32 %v380, 7
          %v382 = vsub.s32 0, %v381
          %v383 = vrot.slane %v378, %v382
          %v385 = vadd.f32 %v376, %v383
          %v386 = vadd.f32 %v377, %v383
          %387 = vst.msk [vmem:[%s228] sm:$0xff] %vm370, %v385
          %388 = vst.msk [vmem:[%s228 + $0x8] sm:$0xff] %vm370, %v386
        $region40: #{tpu_custom_call.1} parent=31 // pred_fallthru
          _
        %s389 = sand.u32 %s128, 1
        %s390 = scalar_lea.sflag [#allocation3], %s389
        %s391 = sand.u32 %s128, 1
        %s392 = smul.addr %s391, 16
        %s393 = scalar_lea.vmem [#allocation2], %s392
        // Predicated region
        $region41: #{tpu_custom_call.1} parent=31 // pred_check
          %p394 = pneg %p138
        $region42: #{tpu_custom_call.1} parent=31 // pred_check_branch
          %396 = sbr.rel (%p394) target = $region44
        $region43: #{tpu_custom_call.1} parent=31 // pred_region
          %s397 = smul.u32 2, %s22
          %s399 = ssub.s32 256, 256
          %400 = vsyncadd %s390, %s399
          %s401 = sadd.s32 %s23, %s397
          %s402 = smul.addr %s401, 128
          %s403 = scalar_lea.hbm %s3, %s402
          %s404 = sshll.u32 %s393, 4
          %s405 = int_to_ptr.vmem [resolvable:$true] %s404
          %410 = dma.vmem_to_hbm [thread:$0]  %s405, 256, %s403, %s390, 128, 128, 8
        $region44: #{tpu_custom_call.1} parent=31 // pred_fallthru
          _
      $region32: #{tpu_custom_call.1} parent=5 // pred_fallthru
        _
      %p411 = scmp.le.s32.totalorder 2, %s12
      // Predicated region
      $region45: #{tpu_custom_call.1} parent=5 // pred_check
        %p412 = pneg %p411
      $region46: #{tpu_custom_call.1} parent=5 // pred_check_branch
        %414 = sbr.rel (%p412) target = $region48
      $region47: #{tpu_custom_call.1} parent=5 // pred_region
        %s415 = ssub.s32 %s12, 2
        // Predicated region
        $region49: #{tpu_custom_call.1} parent=47 // pred_check
          %p416 = pneg %p144
        $region50: #{tpu_custom_call.1} parent=47 // pred_check_branch
          %418 = sbr.rel (%p416) target = $region52
        $region51: #{tpu_custom_call.1} parent=47 // pred_region
          %s419 = sand.u32 %s129, 1
          %s420 = scalar_lea.sflag [#allocation3], %s419
          %s421 = sand.u32 %s129, 1
          %s422 = smul.addr %s421, 16
          %s423 = scalar_lea.vmem [#allocation2], %s422
          %424 = dma.done %s420, 256
        $region52: #{tpu_custom_call.1} parent=47 // pred_fallthru
          _
      $region48: #{tpu_custom_call.1} parent=5 // pred_fallthru
        _
    $region6: #{tpu_custom_call.1} parent=1 // loop_footer
      %s16 = sadd.s32 1, %s12
    $region7: #{tpu_custom_call.1} parent=1 // loop_footer_branch
      %11 = sbr.rel target = $region3
    $region8: #{tpu_custom_call.1} parent=1 // loop_exit
      _
    %425 = vsyncpa [#allocation3], 1
    %s426 = scalar_lea.sflag [#allocation3], 1
    %427 = vsyncpa %s426, 1

</llo_original>
